<compile_context>
chip_gen: v6e
topology: v6e:2x2x1
jax: 0.10.0
libtpu: 0.0.40
codegen_flags: <defaults>
</compile_context>

<pallas_src>
import functools

import jax
import jax.numpy as jnp
import numpy as np
from jax.experimental import pallas as pl
from jax.experimental.pallas import tpu as pltpu


def _round_up(n, m):
    return ((n + m - 1) // m) * m


def _spectral_mul_kernel(x_ref, w_ref, o_ref):
    """Complex channel contraction with a lane-dense flattened frequency axis.

    x_ref: (Ci, 2*Fpad)      [ real | imag ] concatenated on the lane axis
    w_ref: (Ci, Co, 2*Fpad)  same packing
    o_ref: (Co, 2*Fpad)
    out[o, f] = sum_i x[i, f] * w[i, o, f]   (complex, elementwise over f)
    """
    fpad = x_ref.shape[-1] // 2            # 128-aligned split point
    xr = x_ref[:, :fpad][:, None, :]       # (Ci, 1, Fpad), broadcast over Co
    xi = x_ref[:, fpad:][:, None, :]
    wr = w_ref[:, :, :fpad]                # (Ci, Co, Fpad)
    wi = w_ref[:, :, fpad:]
    # VPU broadcast-MAC; the Ci reduction is over the leading (non-minor) axis,
    # i.e. plain slab adds (no XLU).  Karatsuba (3-mult) form was evaluated but
    # is net-neutral/worse here: no f32 FMA on the VPU means mults and adds
    # cost the same VALU slot, and the kernel is memory-bound at Ci=4.
    o_ref[:, :fpad] = jnp.sum(xr * wr - xi * wi, axis=0)   # real, wide store
    o_ref[:, fpad:] = jnp.sum(xr * wi + xi * wr, axis=0)   # imag, wide store
    # NOTE: at production FNO sizes (Ci,Co >= 32, modes >= 32) add a grid axis
    # over Co (and B), accumulate per-Ci directly into o_ref, and set
    # vmem_limit_bytes -- needed for v7x's 64 MiB VMEM budget.


def spectral_mul_packed(x_packed, w_packed):
    """pallas_call: (B, Ci, L) x (Ci, Co, L) -> (B, Co, L), with L = 2*Fpad."""
    B, Ci, L = x_packed.shape
    Co = w_packed.shape[1]
    return pl.pallas_call(
        _spectral_mul_kernel,
        out_shape=jax.ShapeDtypeStruct((B, Co, L), jnp.float32),
        grid=(B,),
        in_specs=[
            pl.BlockSpec((None, Ci, L), lambda b: (b, 0, 0)),   # x: per-batch
            pl.BlockSpec((Ci, Co, L), lambda b: (0, 0, 0)),     # w: resident
        ],
        out_specs=pl.BlockSpec((None, Co, L), lambda b: (b, 0, 0)),
        compiler_params=pltpu.CompilerParams(
            dimension_semantics=("parallel",)),
    )(x_packed, w_packed)


def pack_weights(w1, w2):
    """One-time packing of the complex parameters (do this at init, not per
    forward): stack the two corners, flatten (corner, V, m1, m2) onto the lane
    axis, pad to a multiple of 128, and concatenate real|imag on that axis."""
    Ci, Co, V, M1, M2 = w1.shape
    F = 2 * V * M1 * M2
    Fpad = _round_up(F, 128)
    w = jnp.stack([w1, w2], axis=2).reshape(Ci, Co, F)
    pad = ((0, 0), (0, 0), (0, Fpad - F))
    wr = jnp.pad(jnp.real(w).astype(jnp.float32), pad)
    wi = jnp.pad(jnp.imag(w).astype(jnp.float32), pad)
    return jnp.concatenate([wr, wi], axis=-1)            # (Ci, Co, 2*Fpad)


@functools.partial(jax.jit, static_argnames=("modes1", "modes2"))
def spectral_conv2d(x, w_packed, modes1, modes2):
    """Forward pass of SpectralConv2d.

    x        : (B, Ci, V, H, W) float32
    w_packed : (Ci, Co, 2*Fpad) float32   (from pack_weights)
    returns  : (B, Co, V, H, W) float32
    """
    B, Ci, V, H, W = x.shape
    Co = w_packed.shape[1]
    Wf = W // 2 + 1
    F = 2 * V * modes1 * modes2
    Fpad = w_packed.shape[-1] // 2
    assert H >= 2 * modes1 and modes2 <= Wf   # same implicit assumption as ref

    x_ft = jnp.fft.rfft2(x, axes=(-2, -1))               # (B, Ci, V, H, Wf) c64
    x_lo = x_ft[:, :, :, :modes1, :modes2]               # low positive freqs
    x_hi = x_ft[:, :, :, H - modes1:, :modes2]           # negative freqs
    xc = jnp.stack([x_lo, x_hi], axis=2).reshape(B, Ci, F)
    pad = ((0, 0), (0, 0), (0, Fpad - F))
    x_packed = jnp.concatenate(
        [jnp.pad(jnp.real(xc), pad), jnp.pad(jnp.imag(xc), pad)],
        axis=-1).astype(jnp.float32)                     # (B, Ci, 2*Fpad)

    out_packed = spectral_mul_packed(x_packed, w_packed)  # (B, Co, 2*Fpad)

    out_c = (out_packed[..., :F] + 1j * out_packed[..., Fpad:Fpad + F]
             ).astype(jnp.complex64).reshape(B, Co, 2, V, modes1, modes2)

    # Rebuild the padded spectrum with lax.pad (no full-size zeros + scatter).
    zero = jnp.array(0, dtype=jnp.complex64)
    nop = (0, 0, 0)
    out_ft = (
        jax.lax.pad(out_c[:, :, 0], zero,
                    [nop, nop, nop, (0, H - modes1, 0), (0, Wf - modes2, 0)])
        + jax.lax.pad(out_c[:, :, 1], zero,
                      [nop, nop, nop, (H - modes1, 0, 0), (0, Wf - modes2, 0)]))

    return jnp.fft.irfft2(out_ft, s=(H, W), axes=(-2, -1)).astype(jnp.float32)


def _reference(x, w1, w2, modes1, modes2):
    """Pure-JAX reference (mirrors the PyTorch forward) for validation."""
    B, Ci, V, H, W = x.shape
    Co = w1.shape[1]
    Wf = W // 2 + 1
    x_ft = jnp.fft.rfft2(x, axes=(-2, -1))
    out_ft = jnp.zeros((B, Co, V, H, Wf), dtype=jnp.complex64)
    out_ft = out_ft.at[:, :, :, :modes1, :modes2].set(
        jnp.einsum('bivxy,iovxy->bovxy', x_ft[:, :, :, :modes1, :modes2], w1))
    out_ft = out_ft.at[:, :, :, H - modes1:, :modes2].set(
        jnp.einsum('bivxy,iovxy->bovxy', x_ft[:, :, :, H - modes1:, :modes2], w2))
    return jnp.fft.irfft2(out_ft, s=(H, W), axes=(-2, -1)).astype(jnp.float32)


if __name__ == "__main__":
    # Small shapes consistent with the module (num_vars = 3 from configuration).
    B, Ci, Co, V, H, W = 2, 4, 6, 3, 16, 16
    modes1, modes2 = 6, 6          # modes2 <= W//2 + 1, 2*modes1 <= H

    key = jax.random.PRNGKey(0)
    kx, k1r, k1i, k2r, k2i = jax.random.split(key, 5)

    x = jax.random.normal(kx, (B, Ci, V, H, W), dtype=jnp.float32)

    # Deterministic parameter init mirroring
    #   scale * torch.rand(Ci, Co, V, m1, m2, dtype=cfloat)
    scale = 1.0 / (Ci * Co)
    w_shape = (Ci, Co, V, modes1, modes2)
    w1 = (scale * (jax.random.uniform(k1r, w_shape, dtype=jnp.float32)
                   + 1j * jax.random.uniform(k1i, w_shape, dtype=jnp.float32))
          ).astype(jnp.complex64)
    w2 = (scale * (jax.random.uniform(k2r, w_shape, dtype=jnp.float32)
                   + 1j * jax.random.uniform(k2i, w_shape, dtype=jnp.float32))
          ).astype(jnp.complex64)

    # One-time parameter packing (real/imag split + lane-dense flatten).
    w_packed = jax.block_until_ready(pack_weights(w1, w2))

    out = jax.block_until_ready(spectral_conv2d(x, w_packed, modes1, modes2))
    ref = jax.block_until_ready(_reference(x, w1, w2, modes1, modes2))

    assert out.shape == (B, Co, V, H, W), out.shape
    np.testing.assert_allclose(np.asarray(out), np.asarray(ref),
                               rtol=1e-4, atol=1e-5)
    print("KERNEL_OK")
</pallas_src>

<mosaic_0001>
module attributes {stable_mosaic.version = 11 : i64} {
  func.func @_spectral_mul_kernel(%arg0: i32, %arg1: memref<1x4x512xf32, #tpu.memory_space<vmem>>, %arg2: memref<4x6x512xf32, #tpu.memory_space<vmem>>, %arg3: memref<1x6x512xf32, #tpu.memory_space<vmem>>) attributes {dimension_semantics = [#tpu.dimension_semantics<parallel>], iteration_bounds = array<i64: 2>, scalar_prefetch = 0 : i64, scratch_operands = 0 : i64, tpu.core_type = #tpu.core_type<tc>, window_params = [{transform_indices = @transform_0, window_bounds = array<i64: 1, 4, 512>}, {pipeline_mode = #tpu.pipeline_mode<synchronous>, transform_indices = @transform_1, window_bounds = array<i64: 4, 6, 512>}, {transform_indices = @transform_2, window_bounds = array<i64: 1, 6, 512>}]} {
    %c0 = arith.constant 0 : index
    %c0_0 = arith.constant 0 : index
    %c0_1 = arith.constant 0 : index
    %0 = vector.load %arg1[%c0, %c0_0, %c0_1] : memref<1x4x512xf32, #tpu.memory_space<vmem>>, vector<1x4x256xf32>
    %1 = vector.shape_cast %0 : vector<1x4x256xf32> to vector<4x256xf32>
    %2 = vector.shape_cast %1 : vector<4x256xf32> to vector<4x1x256xf32>
    %c0_2 = arith.constant 0 : index
    %c0_3 = arith.constant 0 : index
    %c256 = arith.constant 256 : index
    %3 = vector.load %arg1[%c0_2, %c0_3, %c256] : memref<1x4x512xf32, #tpu.memory_space<vmem>>, vector<1x4x256xf32>
    %4 = vector.shape_cast %3 : vector<1x4x256xf32> to vector<4x256xf32>
    %5 = vector.shape_cast %4 : vector<4x256xf32> to vector<4x1x256xf32>
    %c0_4 = arith.constant 0 : index
    %c0_5 = arith.constant 0 : index
    %c0_6 = arith.constant 0 : index
    %6 = vector.load %arg2[%c0_4, %c0_5, %c0_6] : memref<4x6x512xf32, #tpu.memory_space<vmem>>, vector<4x6x256xf32>
    %c0_7 = arith.constant 0 : index
    %c0_8 = arith.constant 0 : index
    %c256_9 = arith.constant 256 : index
    %7 = vector.load %arg2[%c0_7, %c0_8, %c256_9] : memref<4x6x512xf32, #tpu.memory_space<vmem>>, vector<4x6x256xf32>
    %8 = vector.broadcast %2 : vector<4x1x256xf32> to vector<4x6x256xf32>
    %9 = arith.mulf %8, %6 : vector<4x6x256xf32>
    %10 = vector.broadcast %5 : vector<4x1x256xf32> to vector<4x6x256xf32>
    %11 = arith.mulf %10, %7 : vector<4x6x256xf32>
    %12 = arith.subf %9, %11 : vector<4x6x256xf32>
    %cst = arith.constant dense<0.000000e+00> : vector<6x256xf32>
    %13 = vector.multi_reduction <add>, %12, %cst [0] : vector<4x6x256xf32> to vector<6x256xf32>
    %c0_10 = arith.constant 0 : index
    %c0_11 = arith.constant 0 : index
    %c0_12 = arith.constant 0 : index
    %14 = vector.load %arg3[%c0_10, %c0_11, %c0_12] : memref<1x6x512xf32, #tpu.memory_space<vmem>>, vector<1x6x256xf32>
    %15 = vector.shape_cast %14 : vector<1x6x256xf32> to vector<6x256xf32>
    %16 = vector.shape_cast %13 : vector<6x256xf32> to vector<1x6x256xf32>
    tpu.vector_store %arg3[%c0_10, %c0_11, %c0_12], %16 {strides = array<i32>} : memref<1x6x512xf32, #tpu.memory_space<vmem>>, vector<1x6x256xf32>,
    %17 = vector.broadcast %2 : vector<4x1x256xf32> to vector<4x6x256xf32>
    %18 = arith.mulf %17, %7 : vector<4x6x256xf32>
    %19 = vector.broadcast %5 : vector<4x1x256xf32> to vector<4x6x256xf32>
    %20 = arith.mulf %19, %6 : vector<4x6x256xf32>
    %21 = arith.addf %18, %20 : vector<4x6x256xf32>
    %cst_13 = arith.constant dense<0.000000e+00> : vector<6x256xf32>
    %22 = vector.multi_reduction <add>, %21, %cst_13 [0] : vector<4x6x256xf32> to vector<6x256xf32>
    %c0_14 = arith.constant 0 : index
    %c0_15 = arith.constant 0 : index
    %c256_16 = arith.constant 256 : index
    %23 = vector.load %arg3[%c0_14, %c0_15, %c256_16] : memref<1x6x512xf32, #tpu.memory_space<vmem>>, vector<1x6x256xf32>
    %24 = vector.shape_cast %23 : vector<1x6x256xf32> to vector<6x256xf32>
    %25 = vector.shape_cast %22 : vector<6x256xf32> to vector<1x6x256xf32>
    tpu.vector_store %arg3[%c0_14, %c0_15, %c256_16], %25 {strides = array<i32>} : memref<1x6x512xf32, #tpu.memory_space<vmem>>, vector<1x6x256xf32>,
    return
  }
  func.func @transform_0(%arg0: i32) -> (i32, i32, i32) {
    %c0_i32 = arith.constant 0 : i32
    %c0_i32_0 = arith.constant 0 : i32
    %c0_i32_1 = arith.constant 0 : i32
    return %arg0, %c0_i32, %c0_i32_0 : i32, i32, i32
  }
  func.func @transform_1(%arg0: i32) -> (i32, i32, i32) {
    %c0_i32 = arith.constant 0 : i32
    %c0_i32_0 = arith.constant 0 : i32
    %c0_i32_1 = arith.constant 0 : i32
    %c0_i32_2 = arith.constant 0 : i32
    return %c0_i32, %c0_i32_0, %c0_i32_1 : i32, i32, i32
  }
  func.func @transform_2(%arg0: i32) -> (i32, i32, i32) {
    %c0_i32 = arith.constant 0 : i32
    %c0_i32_0 = arith.constant 0 : i32
    %c0_i32_1 = arith.constant 0 : i32
    return %arg0, %c0_i32, %c0_i32_0 : i32, i32, i32
  }
}

</mosaic_0001>

<llo_original>
// kernel: spectral_conv2d.1
$region0: #{spectral_conv2d.1}
  #allocation0 [shape = 'u32[]', space=smem, size = 0x4, offset = 0x4, fixed_abs, tag = 'smem constant byte address 0x4 - core index']
  #allocation1 [shape = 'u32[144,128]{1,0:T(1,128)}', space=vmem, size = 0x12000, scoped, tag = 'internal scratch']
  %s0 = inlined_call_operand.vmem [shape: f32[2,4,512], index: 0, kind: input, shape index: {}]
  %s1 = inlined_call_operand.vmem [shape: f32[4,6,512], index: 1, kind: input, shape index: {}]
  %s2 = inlined_call_operand.vmem [shape: f32[2,6,512], index: 2, kind: output, shape index: {}]
  %s3 = sld [smem:[#allocation0]]
  $region41: #{spectral_conv2d.1} parent=0
    _
  %s5 = ssub.s32 1, %s3
  %s6 = scalar_select 0, %s5, %s3
  loop: start=0, step=1, limit=4
  $region2: #{spectral_conv2d.1} parent=0 // loop_pre_header
    _
  $region3: #{spectral_conv2d.1} parent=0 // loop_header
    %s8 = sphi 0, %s12
    %p9 = scmp.ge.s32.totalorder %s8, 4
    %s18 = sphi 0, %s20
    %s21 = sphi 0, %s18
    %s22 = sphi 0, %s21
    %s38 = sphi 0, %s22
    %s42 = sphi 0, %s42
    %s44 = sphi 0, %s42
    %s45 = sphi 0, %s44
    %s59 = sphi 0, %s45
    %s65 = sphi 0, %s67
    %s68 = sphi 0, %s65
    %s69 = sphi 0, %s68
    %s85 = sphi 0, %s69
  $region4: #{spectral_conv2d.1} parent=0 // loop_header_branch
    %11 = sbr.rel (%p9) target = $region8
  $region5: #{spectral_conv2d.1} parent=0 // loop_body
    %s13 = ssub.s32 %s8, 1
    %s14 = ssub.s32 %s8, 2
    %s15 = sadd.s32 %s8, 1
    %s16 = ssub.s32 %s8, %s15
    %p17 = scmp.eq.s32.totalorder %s16, 0
    %s19 = sadd.s32 %s18, 1
    %s20 = scalar_select %p17, %s18, %s19
    %p23 = pneg %p17
    %p24 = scmp.eq.s32.totalorder %s8, 1
    %p25 = por %p23, %p24
    %p26 = scmp.ne.s32.totalorder %s18, %s21
    %p27 = scmp.eq.s32.totalorder %s8, 0
    %p28 = por %p26, %p27
    %p29 = scmp.ne.s32.totalorder %s18, %s21
    %p30 = scmp.eq.s32.totalorder %s13, 1
    %p31 = por %p29, %p30
    %p32 = scmp.ne.s32.totalorder %s21, %s22
    %p33 = scmp.eq.s32.totalorder %s13, 0
    %p34 = por %p32, %p33
    %p35 = scmp.ne.s32.totalorder %s21, %s22
    %p36 = scmp.eq.s32.totalorder %s14, 1
    %p37 = por %p35, %p36
    %p39 = scmp.ne.s32.totalorder %s22, %s38
    %p40 = scmp.eq.s32.totalorder %s14, 0
    %p41 = por %p39, %p40
    %s43 = sadd.s32 %s42, 1
    %p46 = scmp.eq.s32.totalorder %s8, 1
    %p47 = scmp.ne.s32.totalorder %s42, %s44
    %p48 = scmp.eq.s32.totalorder %s8, 0
    %p49 = por %p47, %p48
    %p50 = scmp.ne.s32.totalorder %s42, %s44
    %p51 = scmp.eq.s32.totalorder %s13, 1
    %p52 = por %p50, %p51
    %p53 = scmp.ne.s32.totalorder %s44, %s45
    %p54 = scmp.eq.s32.totalorder %s13, 0
    %p55 = por %p53, %p54
    %p56 = scmp.ne.s32.totalorder %s44, %s45
    %p57 = scmp.eq.s32.totalorder %s14, 1
    %p58 = por %p56, %p57
    %p60 = scmp.ne.s32.totalorder %s45, %s59
    %p61 = scmp.eq.s32.totalorder %s14, 0
    %p62 = por %p60, %p61
    %s63 = ssub.s32 %s8, %s15
    %p64 = scmp.eq.s32.totalorder %s63, 0
    %s66 = sadd.s32 %s65, 1
    %s67 = scalar_select %p64, %s65, %s66
    %p70 = pneg %p64
    %p71 = scmp.eq.s32.totalorder %s8, 1
    %p72 = por %p70, %p71
    %p73 = scmp.ne.s32.totalorder %s65, %s68
    %p74 = scmp.eq.s32.totalorder %s8, 0
    %p75 = por %p73, %p74
    %p76 = scmp.ne.s32.totalorder %s65, %s68
    %p77 = scmp.eq.s32.totalorder %s13, 1
    %p78 = por %p76, %p77
    %p79 = scmp.ne.s32.totalorder %s68, %s69
    %p80 = scmp.eq.s32.totalorder %s13, 0
    %p81 = por %p79, %p80
    %p82 = scmp.ne.s32.totalorder %s68, %s69
    %p83 = scmp.eq.s32.totalorder %s14, 1
    %p84 = por %p82, %p83
    %p86 = scmp.ne.s32.totalorder %s69, %s85
    %p87 = scmp.eq.s32.totalorder %s14, 0
    %p88 = por %p86, %p87
    %p89 = scmp.le.s32.totalorder 1, %s8
    %p90 = scmp.lt.s32.totalorder %s8, 3
    %p91 = pnand %p89, %p90
    %p92 = pneg %p91
    // Predicated region
    $region9: #{spectral_conv2d.1} parent=5 // pred_check
      _
    $region10: #{spectral_conv2d.1} parent=5 // pred_check_branch
      %94 = sbr.rel (%p91) target = $region12
    $region11: #{spectral_conv2d.1} parent=5 // pred_region
      %s95 = ssub.s32 %s8, 1
      // Predicated region
      $region13: #{spectral_conv2d.1} parent=11 // pred_check
        %p96 = pneg %p55
      $region14: #{spectral_conv2d.1} parent=11 // pred_check_branch
        %98 = sbr.rel (%p96) target = $region16
      $region15: #{spectral_conv2d.1} parent=11 // pred_region
        _
      $region16: #{spectral_conv2d.1} parent=11 // pred_fallthru
        _
    $region12: #{spectral_conv2d.1} parent=5 // pred_fallthru
      _
    %p99 = scmp.lt.s32.totalorder %s8, 2
    // Predicated region
    $region17: #{spectral_conv2d.1} parent=5 // pred_check
      %p100 = pneg %p99
    $region18: #{spectral_conv2d.1} parent=5 // pred_check_branch
      %102 = sbr.rel (%p100) target = $region20
    $region19: #{spectral_conv2d.1} parent=5 // pred_region
      // Predicated region
      $region21: #{spectral_conv2d.1} parent=19 // pred_check
        %p103 = pneg %p28
      $region22: #{spectral_conv2d.1} parent=19 // pred_check_branch
        %105 = sbr.rel (%p103) target = $region24
      $region23: #{spectral_conv2d.1} parent=19 // pred_region
        %p106 = scmp.lt.s32.totalorder %s8, 1
        %s107 = scalar_select %p106, %s8, 1
        %s108 = smul.addr %s107, 4
        %s109 = smul.addr %s108, 4
        %s110 = scalar_lea.vmem %s0, %s109
      $region24: #{spectral_conv2d.1} parent=19 // pred_fallthru
        _
    $region20: #{spectral_conv2d.1} parent=5 // pred_fallthru
      _
    %p111 = scmp.le.s32.totalorder 1, %s8
    %p112 = scmp.lt.s32.totalorder %s8, 3
    %p113 = pnand %p111, %p112
    %p114 = pneg %p113
    // Predicated region
    $region25: #{spectral_conv2d.1} parent=5 // pred_check
      _
    $region26: #{spectral_conv2d.1} parent=5 // pred_check_branch
      %116 = sbr.rel (%p113) target = $region28
    $region27: #{spectral_conv2d.1} parent=5 // pred_region
      %s117 = ssub.s32 %s8, 1
      %p118 = scmp.lt.s32.totalorder %s13, 1
      %s119 = scalar_select %p118, %s13, 1
      %s120 = smul.addr %s119, 4
      %s121 = smul.addr %s120, 4
      %s122 = scalar_lea.vmem %s0, %s121
      %p123 = pneg %p34
      %p124 = pneg %p31
      %p125 = pneg %p55
      %p126 = pneg %p52
      %p127 = pneg %p81
      %p128 = pneg %p78
      %p129 = scmp.lt.s32.totalorder %s13, 1
      %s130 = scalar_select %p129, %s13, 1
      %s131 = smul.addr %s130, 4
      %s132 = smul.addr %s131, 8
      %s133 = scalar_lea.vmem %s2, %s132
      %p134 = scmp.lt.s32.totalorder %s13, 1
      %s135 = scalar_select %p134, %s13, 1
      %s136 = smul.addr %s135, 4
      %s137 = smul.addr %s136, 4
      %s138 = scalar_lea.vmem %s0, %s137
      %p139 = scmp.lt.s32.totalorder %s13, 1
      %s140 = scalar_select %p139, %s13, 1
      %s141 = smul.addr %s140, 4
      %s142 = smul.addr %s141, 8
      %s143 = scalar_lea.vmem %s2, %s142
      %v144 = vld [vmem:[%s138] sm:$0xff]
      %v147 = vunpack.c.l.s4 1966171168
      %v148 = vunpack.c.0.s8 %v147
      %v149 = vlaneseq
      %v150 = vshrl.u32 %v149, 7
      %v151 = vsub.s32 %v148, %v150
      %v152 = vrot.slane %v144, %v151
      %v153 = vcombine.high %v152, %v152
      %v155 = vunpack.c.l.s4 1966171168
      %v156 = vunpack.c.0.s8 %v155
      %v157 = vlaneseq
      %v158 = vshrl.u32 %v157, 7
      %v159 = vsub.s32 %v156, %v158
      %v160 = vrot.slane %v152, %v159
      %v162 = vunpack.c.l.s4 1966171168
      %v163 = vunpack.c.0.s8 %v162
      %v164 = vlaneseq
      %v165 = vshrl.u32 %v164, 7
      %v166 = vsub.s32 %v163, %v165
      %v167 = vrot.slane %v153, %v166
      %v168 = vcombine.high %v160, %v160
      %v169 = vcombine.high %v167, %v167
      %v170 = vld [vmem:[%s138 + $0x8] sm:$0xff]
      %v173 = vunpack.c.l.s4 1966171168
      %v174 = vunpack.c.0.s8 %v173
      %v175 = vlaneseq
      %v176 = vshrl.u32 %v175, 7
      %v177 = vsub.s32 %v174, %v176
      %v178 = vrot.slane %v170, %v177
      %v179 = vcombine.high %v178, %v178
      %v181 = vunpack.c.l.s4 1966171168
      %v182 = vunpack.c.0.s8 %v181
      %v183 = vlaneseq
      %v184 = vshrl.u32 %v183, 7
      %v185 = vsub.s32 %v182, %v184
      %v186 = vrot.slane %v178, %v185
      %v188 = vunpack.c.l.s4 1966171168
      %v189 = vunpack.c.0.s8 %v188
      %v190 = vlaneseq
      %v191 = vshrl.u32 %v190, 7
      %v192 = vsub.s32 %v189, %v191
      %v193 = vrot.slane %v179, %v192
      %v194 = vcombine.high %v186, %v186
      %v195 = vcombine.high %v193, %v193
      %v196 = vld [vmem:[%s1] sm:$0x3f]
      %v197 = vld [vmem:[%s1 + $0x8] sm:$0x3f]
      %v198 = vld [vmem:[%s1 + $0x20] sm:$0x3f]
      %v199 = vld [vmem:[%s1 + $0x28] sm:$0x3f]
      %v200 = vld [vmem:[%s1 + $0x40] sm:$0x3f]
      %v201 = vld [vmem:[%s1 + $0x48] sm:$0x3f]
      %v202 = vld [vmem:[%s1 + $0x60] sm:$0x3f]
      %v203 = vld [vmem:[%s1 + $0x68] sm:$0x3f]
      %v204 = vld [vmem:[%s1 + $0x10] sm:$0x3f]
      %v205 = vld [vmem:[%s1 + $0x18] sm:$0x3f]
      %v206 = vld [vmem:[%s1 + $0x30] sm:$0x3f]
      %v207 = vld [vmem:[%s1 + $0x38] sm:$0x3f]
      %v208 = vld [vmem:[%s1 + $0x50] sm:$0x3f]
      %v209 = vld [vmem:[%s1 + $0x58] sm:$0x3f]
      %v210 = vld [vmem:[%s1 + $0x70] sm:$0x3f]
      %v211 = vld [vmem:[%s1 + $0x78] sm:$0x3f]
      %v212 = vlaneseq
      %v213 = vshrl.u32 %v212, 7
      %v214 = vsub.s32 0, %v213
      %v215 = vrot.slane %v160, %v214
      %v216 = vlaneseq
      %v217 = vshrl.u32 %v216, 7
      %v218 = vsub.s32 1, %v217
      %v219 = vrot.slane %v160, %v218
      %v220 = vlaneseq
      %v221 = vshrl.u32 %v220, 7
      %v222 = vsub.s32 0, %v221
      %v223 = vrot.slane %v167, %v222
      %v224 = vlaneseq
      %v225 = vshrl.u32 %v224, 7
      %v226 = vsub.s32 1, %v225
      %v227 = vrot.slane %v167, %v226
      %v228 = vlaneseq
      %v229 = vshrl.u32 %v228, 7
      %v230 = vsub.s32 0, %v229
      %v231 = vrot.slane %v168, %v230
      %v232 = vlaneseq
      %v233 = vshrl.u32 %v232, 7
      %v234 = vsub.s32 1, %v233
      %v235 = vrot.slane %v168, %v234
      %v236 = vlaneseq
      %v237 = vshrl.u32 %v236, 7
      %v238 = vsub.s32 0, %v237
      %v239 = vrot.slane %v169, %v238
      %v240 = vlaneseq
      %v241 = vshrl.u32 %v240, 7
      %v242 = vsub.s32 1, %v241
      %v243 = vrot.slane %v169, %v242
      %v252 = vmul.f32 %v215, %v196
      %v253 = vmul.f32 %v219, %v197
      %v254 = vmul.f32 %v223, %v198
      %v255 = vmul.f32 %v227, %v199
      %v256 = vmul.f32 %v231, %v200
      %v257 = vmul.f32 %v235, %v201
      %v258 = vmul.f32 %v239, %v202
      %v259 = vmul.f32 %v243, %v203
      %v260 = vlaneseq
      %v261 = vshrl.u32 %v260, 7
      %v262 = vsub.s32 0, %v261
      %v263 = vrot.slane %v186, %v262
      %v264 = vlaneseq
      %v265 = vshrl.u32 %v264, 7
      %v266 = vsub.s32 1, %v265
      %v267 = vrot.slane %v186, %v266
      %v268 = vlaneseq
      %v269 = vshrl.u32 %v268, 7
      %v270 = vsub.s32 0, %v269
      %v271 = vrot.slane %v193, %v270
      %v272 = vlaneseq
      %v273 = vshrl.u32 %v272, 7
      %v274 = vsub.s32 1, %v273
      %v275 = vrot.slane %v193, %v274
      %v276 = vlaneseq
      %v277 = vshrl.u32 %v276, 7
      %v278 = vsub.s32 0, %v277
      %v279 = vrot.slane %v194, %v278
      %v280 = vlaneseq
      %v281 = vshrl.u32 %v280, 7
      %v282 = vsub.s32 1, %v281
      %v283 = vrot.slane %v194, %v282
      %v284 = vlaneseq
      %v285 = vshrl.u32 %v284, 7
      %v286 = vsub.s32 0, %v285
      %v287 = vrot.slane %v195, %v286
      %v288 = vlaneseq
      %v289 = vshrl.u32 %v288, 7
      %v290 = vsub.s32 1, %v289
      %v291 = vrot.slane %v195, %v290
      %v300 = vmul.f32 %v263, %v204
      %v301 = vmul.f32 %v267, %v205
      %v302 = vmul.f32 %v271, %v206
      %v303 = vmul.f32 %v275, %v207
      %v304 = vmul.f32 %v279, %v208
      %v305 = vmul.f32 %v283, %v209
      %v306 = vmul.f32 %v287, %v210
      %v307 = vmul.f32 %v291, %v211
      %v308 = vsub.f32 %v252, %v300
      %v309 = vsub.f32 %v253, %v301
      %v310 = vsub.f32 %v254, %v302
      %v311 = vsub.f32 %v255, %v303
      %v312 = vsub.f32 %v256, %v304
      %v313 = vsub.f32 %v257, %v305
      %v314 = vsub.f32 %v258, %v306
      %v315 = vsub.f32 %v259, %v307
      %vm316 = vcmask 1045504
      %v317 = vsel %vm316, %v308, 0.0
      %v318 = vsel %vm316, %v310, 0.0
      %v319 = vadd.f32 %v317, %v318
      %v320 = vsel %vm316, %v312, 0.0
      %v321 = vadd.f32 %v319, %v320
      %v322 = vsel %vm316, %v314, 0.0
      %v323 = vadd.f32 %v321, %v322
      %v324 = vsel %vm316, %v309, 0.0
      %v325 = vsel %vm316, %v311, 0.0
      %v326 = vadd.f32 %v324, %v325
      %v327 = vsel %vm316, %v313, 0.0
      %v328 = vadd.f32 %v326, %v327
      %v329 = vsel %vm316, %v315, 0.0
      %v330 = vadd.f32 %v328, %v329
      %331 = vst [vmem:[%s143] sm:$0x3f] %v323
      %332 = vst [vmem:[%s143 + $0x8] sm:$0x3f] %v330
      %v333 = vmul.f32 %v215, %v204
      %v334 = vmul.f32 %v219, %v205
      %v335 = vmul.f32 %v223, %v206
      %v336 = vmul.f32 %v227, %v207
      %v337 = vmul.f32 %v231, %v208
      %v338 = vmul.f32 %v235, %v209
      %v339 = vmul.f32 %v239, %v210
      %v340 = vmul.f32 %v243, %v211
      %v341 = vmul.f32 %v263, %v196
      %v342 = vmul.f32 %v267, %v197
      %v343 = vmul.f32 %v271, %v198
      %v344 = vmul.f32 %v275, %v199
      %v345 = vmul.f32 %v279, %v200
      %v346 = vmul.f32 %v283, %v201
      %v347 = vmul.f32 %v287, %v202
      %v348 = vmul.f32 %v291, %v203
      %v349 = vadd.f32 %v333, %v341
      %v350 = vadd.f32 %v334, %v342
      %v351 = vadd.f32 %v335, %v343
      %v352 = vadd.f32 %v336, %v344
      %v353 = vadd.f32 %v337, %v345
      %v354 = vadd.f32 %v338, %v346
      %v355 = vadd.f32 %v339, %v347
      %v356 = vadd.f32 %v340, %v348
      %v357 = vsel %vm316, %v349, 0.0
      %v358 = vsel %vm316, %v351, 0.0
      %v359 = vadd.f32 %v357, %v358
      %v360 = vsel %vm316, %v353, 0.0
      %v361 = vadd.f32 %v359, %v360
      %v362 = vsel %vm316, %v355, 0.0
      %v363 = vadd.f32 %v361, %v362
      %v364 = vsel %vm316, %v350, 0.0
      %v365 = vsel %vm316, %v352, 0.0
      %v366 = vadd.f32 %v364, %v365
      %v367 = vsel %vm316, %v354, 0.0
      %v368 = vadd.f32 %v366, %v367
      %v369 = vsel %vm316, %v356, 0.0
      %v370 = vadd.f32 %v368, %v369
      %371 = vst [vmem:[%s143 + $0x10] sm:$0x3f] %v363
      %372 = vst [vmem:[%s143 + $0x18] sm:$0x3f] %v370
      %p373 = scmp.lt.s32.totalorder %s13, 1
      %s374 = scalar_select %p373, %s13, 1
      %s375 = smul.addr %s374, 4
      %s376 = smul.addr %s375, 8
      %s377 = scalar_lea.vmem %s2, %s376
      // Predicated region
      $region29: #{spectral_conv2d.1} parent=27 // pred_check
        %p378 = pneg %p78
      $region30: #{spectral_conv2d.1} parent=27 // pred_check_branch
        %380 = sbr.rel (%p378) target = $region32
      $region31: #{spectral_conv2d.1} parent=27 // pred_region
        _
      $region32: #{spectral_conv2d.1} parent=27 // pred_fallthru
        _
    $region28: #{spectral_conv2d.1} parent=5 // pred_fallthru
      _
    %p381 = scmp.le.s32.totalorder 2, %s8
    // Predicated region
    $region33: #{spectral_conv2d.1} parent=5 // pred_check
      %p382 = pneg %p381
    $region34: #{spectral_conv2d.1} parent=5 // pred_check_branch
      %384 = sbr.rel (%p382) target = $region36
    $region35: #{spectral_conv2d.1} parent=5 // pred_region
      %s385 = ssub.s32 %s8, 2
      // Predicated region
      $region37: #{spectral_conv2d.1} parent=35 // pred_check
        %p386 = pneg %p84
      $region38: #{spectral_conv2d.1} parent=35 // pred_check_branch
        %388 = sbr.rel (%p386) target = $region40
      $region39: #{spectral_conv2d.1} parent=35 // pred_region
        %p389 = scmp.lt.s32.totalorder %s14, 1
        %s390 = scalar_select %p389, %s14, 1
        %s391 = smul.addr %s390, 4
        %s392 = smul.addr %s391, 8
        %s393 = scalar_lea.vmem %s2, %s392
      $region40: #{spectral_conv2d.1} parent=35 // pred_fallthru
        _
    $region36: #{spectral_conv2d.1} parent=5 // pred_fallthru
      _
  $region6: #{spectral_conv2d.1} parent=0 // loop_footer
    %s12 = sadd.s32 1, %s8
  $region7: #{spectral_conv2d.1} parent=0 // loop_footer_branch
    %7 = sbr.rel target = $region3
  $region8: #{spectral_conv2d.1} parent=0 // loop_exit
    _

// kernel: reverse.1
$region0: #{reverse.1}
  %s0 = inlined_call_operand.vmem [shape: f32[2,6,3,16,7], index: 0, kind: input, shape index: {}]
  %s1 = inlined_call_operand.vmem [shape: f32[2,6,3,16,7], index: 1, kind: output, shape index: {}]
  $region1: #{reverse.1} parent=0
    #allocation0 [shape = 'u8[294912]{0}', space=vmem, size = 0x48000, scoped, tag = 'operand span for operand 0']
    #allocation1 [shape = 'u8[147456]{0}', space=vmem, size = 0x24000, scoped, tag = 'operand span for operand 1']
    %s2 = scalar_lea.vmem [#allocation0], 8
    // Predicated region
    $region2: #{reverse.1} parent=1 // pred_check
      _
    $region3: #{reverse.1} parent=1 // pred_check_branch
      %4 = sbr.rel (0) target = $region5
    $region4: #{reverse.1} parent=1 // pred_region
      // Predicated region
      $region6: #{reverse.1} parent=4 // pred_check
        _
      $region7: #{reverse.1} parent=4 // pred_check_branch
        %6 = sbr.rel (0) target = $region9
      $region8: #{reverse.1} parent=4 // pred_region
        // Predicated region
        $region21: #{reverse.1} parent=8 // pred_check
          _
        $region22: #{reverse.1} parent=8 // pred_check_branch
          %92 = sbr.rel (0) target = $region24
        $region23: #{reverse.1} parent=8 // pred_region
          loop: start=0, step=1, limit=1
          $region25: #{reverse.1} parent=23 // loop_pre_header
            _
          $region26: #{reverse.1} parent=23 // loop_header
            %s94 = sphi 0, %s98
            %p95 = scmp.ge.s32.totalorder %s94, 1
            %s99 = sphi %s0, %s0
            %s100 = sphi %s2, %s2
          $region27: #{reverse.1} parent=23 // loop_header_branch
            %97 = sbr.rel (%p95) target = $region31
          $region28: #{reverse.1} parent=23 // loop_body
            %v101 = vld [vmem:[%s99] sm:$0xff]
            %102 = vst [vmem:[%s100] sm:$0xff] %v101
            %v103 = vld [vmem:[%s99 + $0x8] sm:$0xff]
            %104 = vst [vmem:[%s100 + $0x10] sm:$0xff] %v103
            %v105 = vld [vmem:[%s99 + $0x10] sm:$0xff]
            %106 = vst [vmem:[%s100 + $0x20] sm:$0xff] %v105
            %v107 = vld [vmem:[%s99 + $0x18] sm:$0xff]
            %108 = vst [vmem:[%s100 + $0x30] sm:$0xff] %v107
            %v109 = vld [vmem:[%s99 + $0x20] sm:$0xff]
            %110 = vst [vmem:[%s100 + $0x40] sm:$0xff] %v109
            %v111 = vld [vmem:[%s99 + $0x28] sm:$0xff]
            %112 = vst [vmem:[%s100 + $0x50] sm:$0xff] %v111
            %v113 = vld [vmem:[%s99 + $0x30] sm:$0xff]
            %114 = vst [vmem:[%s100 + $0x60] sm:$0xff] %v113
            %v115 = vld [vmem:[%s99 + $0x38] sm:$0xff]
            %116 = vst [vmem:[%s100 + $0x70] sm:$0xff] %v115
            %v117 = vld [vmem:[%s99 + $0x40] sm:$0xff]
            %118 = vst [vmem:[%s100 + $0x80] sm:$0xff] %v117
            %v119 = vld [vmem:[%s99 + $0x48] sm:$0xff]
            %120 = vst [vmem:[%s100 + $0x90] sm:$0xff] %v119
            %v121 = vld [vmem:[%s99 + $0x50] sm:$0xff]
            %122 = vst [vmem:[%s100 + $0xa0] sm:$0xff] %v121
            %v123 = vld [vmem:[%s99 + $0x58] sm:$0xff]
            %124 = vst [vmem:[%s100 + $0xb0] sm:$0xff] %v123
            %v125 = vld [vmem:[%s99 + $0x60] sm:$0xff]
            %126 = vst [vmem:[%s100 + $0xc0] sm:$0xff] %v125
            %v127 = vld [vmem:[%s99 + $0x68] sm:$0xff]
            %128 = vst [vmem:[%s100 + $0xd0] sm:$0xff] %v127
            %v129 = vld [vmem:[%s99 + $0x70] sm:$0xff]
            %130 = vst [vmem:[%s100 + $0xe0] sm:$0xff] %v129
            %v131 = vld [vmem:[%s99 + $0x78] sm:$0xff]
            %132 = vst [vmem:[%s100 + $0xf0] sm:$0xff] %v131
            %v133 = vld [vmem:[%s99 + $0x80] sm:$0xff]
            %134 = vst [vmem:[%s100 + $0x100] sm:$0xff] %v133
            %v135 = vld [vmem:[%s99 + $0x88] sm:$0xff]
            %136 = vst [vmem:[%s100 + $0x110] sm:$0xff] %v135
            %v137 = vld [vmem:[%s99 + $0x90] sm:$0xff]
            %138 = vst [vmem:[%s100 + $0x120] sm:$0xff] %v137
            %v139 = vld [vmem:[%s99 + $0x98] sm:$0xff]
            %140 = vst [vmem:[%s100 + $0x130] sm:$0xff] %v139
            %v141 = vld [vmem:[%s99 + $0xa0] sm:$0xff]
            %142 = vst [vmem:[%s100 + $0x140] sm:$0xff] %v141
            %v143 = vld [vmem:[%s99 + $0xa8] sm:$0xff]
            %144 = vst [vmem:[%s100 + $0x150] sm:$0xff] %v143
            %v145 = vld [vmem:[%s99 + $0xb0] sm:$0xff]
            %146 = vst [vmem:[%s100 + $0x160] sm:$0xff] %v145
            %v147 = vld [vmem:[%s99 + $0xb8] sm:$0xff]
            %148 = vst [vmem:[%s100 + $0x170] sm:$0xff] %v147
            %v149 = vld [vmem:[%s99 + $0xc0] sm:$0xff]
            %150 = vst [vmem:[%s100 + $0x180] sm:$0xff] %v149
            %v151 = vld [vmem:[%s99 + $0xc8] sm:$0xff]
            %152 = vst [vmem:[%s100 + $0x190] sm:$0xff] %v151
            %v153 = vld [vmem:[%s99 + $0xd0] sm:$0xff]
            %154 = vst [vmem:[%s100 + $0x1a0] sm:$0xff] %v153
            %v155 = vld [vmem:[%s99 + $0xd8] sm:$0xff]
            %156 = vst [vmem:[%s100 + $0x1b0] sm:$0xff] %v155
            %v157 = vld [vmem:[%s99 + $0xe0] sm:$0xff]
            %158 = vst [vmem:[%s100 + $0x1c0] sm:$0xff] %v157
            %v159 = vld [vmem:[%s99 + $0xe8] sm:$0xff]
            %160 = vst [vmem:[%s100 + $0x1d0] sm:$0xff] %v159
            %v161 = vld [vmem:[%s99 + $0xf0] sm:$0xff]
            %162 = vst [vmem:[%s100 + $0x1e0] sm:$0xff] %v161
            %v163 = vld [vmem:[%s99 + $0xf8] sm:$0xff]
            %164 = vst [vmem:[%s100 + $0x1f0] sm:$0xff] %v163
            %v165 = vld [vmem:[%s99 + $0x100] sm:$0xff]
            %166 = vst [vmem:[%s100 + $0x200] sm:$0xff] %v165
            %v167 = vld [vmem:[%s99 + $0x108] sm:$0xff]
            %168 = vst [vmem:[%s100 + $0x210] sm:$0xff] %v167
            %v169 = vld [vmem:[%s99 + $0x110] sm:$0xff]
            %170 = vst [vmem:[%s100 + $0x220] sm:$0xff] %v169
            %v171 = vld [vmem:[%s99 + $0x118] sm:$0xff]
            %172 = vst [vmem:[%s100 + $0x230] sm:$0xff] %v171
          $region29: #{reverse.1} parent=23 // loop_footer
            %s98 = sadd.s32 1, %s94
          $region30: #{reverse.1} parent=23 // loop_footer_branch
            %93 = sbr.rel target = $region26
          $region31: #{reverse.1} parent=23 // loop_exit
            _
        $region24: #{reverse.1} parent=8 // pred_fallthru
          _
        // Predicated region
        $region32: #{reverse.1} parent=8 // pred_check
          _
        $region33: #{reverse.1} parent=8 // pred_check_branch
          %174 = sbr.rel target = $region35
        $region34: #{reverse.1} parent=8 // pred_region
          _
        $region35: #{reverse.1} parent=8 // pred_fallthru
          _
      $region9: #{reverse.1} parent=4 // pred_fallthru
        _
      // Predicated region
      $region10: #{reverse.1} parent=4 // pred_check
        _
      $region11: #{reverse.1} parent=4 // pred_check_branch
        %8 = sbr.rel target = $region13
      $region12: #{reverse.1} parent=4 // pred_region
        %s10 = ssub.s32 256, 1
        loop: start=0, step=1, limit=1
        $region14: #{reverse.1} parent=12 // loop_pre_header
          _
        $region15: #{reverse.1} parent=12 // loop_header
          %s12 = sphi 0, %s16
          %p13 = scmp.ge.s32.totalorder %s12, 1
          %s17 = sphi %s0, %s0
          %s18 = sphi %s2, %s2
        $region16: #{reverse.1} parent=12 // loop_header_branch
          %15 = sbr.rel (%p13) target = $region20
        $region17: #{reverse.1} parent=12 // loop_body
          %v19 = vld [vmem:[%s17] sm:%s10]
          %20 = vst [vmem:[%s18] sm:%s10] %v19
          %v21 = vld [vmem:[%s17 + $0x8] sm:%s10]
          %22 = vst [vmem:[%s18 + $0x10] sm:%s10] %v21
          %v23 = vld [vmem:[%s17 + $0x10] sm:%s10]
          %24 = vst [vmem:[%s18 + $0x20] sm:%s10] %v23
          %v25 = vld [vmem:[%s17 + $0x18] sm:%s10]
          %26 = vst [vmem:[%s18 + $0x30] sm:%s10] %v25
          %v27 = vld [vmem:[%s17 + $0x20] sm:%s10]
          %28 = vst [vmem:[%s18 + $0x40] sm:%s10] %v27
          %v29 = vld [vmem:[%s17 + $0x28] sm:%s10]
          %30 = vst [vmem:[%s18 + $0x50] sm:%s10] %v29
          %v31 = vld [vmem:[%s17 + $0x30] sm:%s10]
          %32 = vst [vmem:[%s18 + $0x60] sm:%s10] %v31
          %v33 = vld [vmem:[%s17 + $0x38] sm:%s10]
          %34 = vst [vmem:[%s18 + $0x70] sm:%s10] %v33
          %v35 = vld [vmem:[%s17 + $0x40] sm:%s10]
          %36 = vst [vmem:[%s18 + $0x80] sm:%s10] %v35
          %v37 = vld [vmem:[%s17 + $0x48] sm:%s10]
          %38 = vst [vmem:[%s18 + $0x90] sm:%s10] %v37
          %v39 = vld [vmem:[%s17 + $0x50] sm:%s10]
          %40 = vst [vmem:[%s18 + $0xa0] sm:%s10] %v39
          %v41 = vld [vmem:[%s17 + $0x58] sm:%s10]
          %42 = vst [vmem:[%s18 + $0xb0] sm:%s10] %v41
          %v43 = vld [vmem:[%s17 + $0x60] sm:%s10]
          %44 = vst [vmem:[%s18 + $0xc0] sm:%s10] %v43
          %v45 = vld [vmem:[%s17 + $0x68] sm:%s10]
          %46 = vst [vmem:[%s18 + $0xd0] sm:%s10] %v45
          %v47 = vld [vmem:[%s17 + $0x70] sm:%s10]
          %48 = vst [vmem:[%s18 + $0xe0] sm:%s10] %v47
          %v49 = vld [vmem:[%s17 + $0x78] sm:%s10]
          %50 = vst [vmem:[%s18 + $0xf0] sm:%s10] %v49
          %v51 = vld [vmem:[%s17 + $0x80] sm:%s10]
          %52 = vst [vmem:[%s18 + $0x100] sm:%s10] %v51
          %v53 = vld [vmem:[%s17 + $0x88] sm:%s10]
          %54 = vst [vmem:[%s18 + $0x110] sm:%s10] %v53
          %v55 = vld [vmem:[%s17 + $0x90] sm:%s10]
          %56 = vst [vmem:[%s18 + $0x120] sm:%s10] %v55
          %v57 = vld [vmem:[%s17 + $0x98] sm:%s10]
          %58 = vst [vmem:[%s18 + $0x130] sm:%s10] %v57
          %v59 = vld [vmem:[%s17 + $0xa0] sm:%s10]
          %60 = vst [vmem:[%s18 + $0x140] sm:%s10] %v59
          %v61 = vld [vmem:[%s17 + $0xa8] sm:%s10]
          %62 = vst [vmem:[%s18 + $0x150] sm:%s10] %v61
          %v63 = vld [vmem:[%s17 + $0xb0] sm:%s10]
          %64 = vst [vmem:[%s18 + $0x160] sm:%s10] %v63
          %v65 = vld [vmem:[%s17 + $0xb8] sm:%s10]
          %66 = vst [vmem:[%s18 + $0x170] sm:%s10] %v65
          %v67 = vld [vmem:[%s17 + $0xc0] sm:%s10]
          %68 = vst [vmem:[%s18 + $0x180] sm:%s10] %v67
          %v69 = vld [vmem:[%s17 + $0xc8] sm:%s10]
          %70 = vst [vmem:[%s18 + $0x190] sm:%s10] %v69
          %v71 = vld [vmem:[%s17 + $0xd0] sm:%s10]
          %72 = vst [vmem:[%s18 + $0x1a0] sm:%s10] %v71
          %v73 = vld [vmem:[%s17 + $0xd8] sm:%s10]
          %74 = vst [vmem:[%s18 + $0x1b0] sm:%s10] %v73
          %v75 = vld [vmem:[%s17 + $0xe0] sm:%s10]
          %76 = vst [vmem:[%s18 + $0x1c0] sm:%s10] %v75
          %v77 = vld [vmem:[%s17 + $0xe8] sm:%s10]
          %78 = vst [vmem:[%s18 + $0x1d0] sm:%s10] %v77
          %v79 = vld [vmem:[%s17 + $0xf0] sm:%s10]
          %80 = vst [vmem:[%s18 + $0x1e0] sm:%s10] %v79
          %v81 = vld [vmem:[%s17 + $0xf8] sm:%s10]
          %82 = vst [vmem:[%s18 + $0x1f0] sm:%s10] %v81
          %v83 = vld [vmem:[%s17 + $0x100] sm:%s10]
          %84 = vst [vmem:[%s18 + $0x200] sm:%s10] %v83
          %v85 = vld [vmem:[%s17 + $0x108] sm:%s10]
          %86 = vst [vmem:[%s18 + $0x210] sm:%s10] %v85
          %v87 = vld [vmem:[%s17 + $0x110] sm:%s10]
          %88 = vst [vmem:[%s18 + $0x220] sm:%s10] %v87
          %v89 = vld [vmem:[%s17 + $0x118] sm:%s10]
          %90 = vst [vmem:[%s18 + $0x230] sm:%s10] %v89
        $region18: #{reverse.1} parent=12 // loop_footer
          %s16 = sadd.s32 1, %s12
        $region19: #{reverse.1} parent=12 // loop_footer_branch
          %11 = sbr.rel target = $region15
        $region20: #{reverse.1} parent=12 // loop_exit
          _
      $region13: #{reverse.1} parent=4 // pred_fallthru
        _
    $region5: #{reverse.1} parent=1 // pred_fallthru
      _
    %175 = vnop
    %s176 = scalar_lea.vmem [#allocation0], 7
    %v177 = vld [vmem:[%s176] ss:$-1 sm:$0xff]
    %v178 = vrot.slane %v177, 1
    %179 = vst [vmem:[#allocation1] sm:$0xff] %v178
    %s180 = scalar_lea.vmem [#allocation0], 8
    %s181 = scalar_lea.vmem %s180, 7 [#allocation0]
    %v182 = vld [vmem:[%s181] ss:$-1 sm:$0xff]
    %v183 = vrot.slane %v182, 1
    %v184 = vlaneseq
    %v185 = vshrl.u32 %v184, 7
    %vm186 = vcmp.lt.s32.totalorder %v185, 7
    %187 = vst.msk [vmem:[#allocation1] sm:$0xff] %vm186, %v183
    %s188 = scalar_lea.vmem [#allocation1], 8
    %s189 = scalar_lea.vmem [#allocation0], 16
    %s190 = scalar_lea.vmem %s189, 7 [#allocation0]
    %v191 = vld [vmem:[%s190] ss:$-1 sm:$0xff]
    %v192 = vrot.slane %v191, 1
    %193 = vst [vmem:[%s188] sm:$0xff] %v192
    %s194 = scalar_lea.vmem %s189, 8 [#allocation0]
    %s195 = scalar_lea.vmem %s194, 7 [#allocation0]
    %v196 = vld [vmem:[%s195] ss:$-1 sm:$0xff]
    %v197 = vrot.slane %v196, 1
    %v198 = vlaneseq
    %v199 = vshrl.u32 %v198, 7
    %vm200 = vcmp.lt.s32.totalorder %v199, 7
    %201 = vst.msk [vmem:[%s188] sm:$0xff] %vm200, %v197
    %s202 = scalar_lea.vmem [#allocation1], 16
    %s203 = scalar_lea.vmem [#allocation0], 32
    %s204 = scalar_lea.vmem %s203, 7 [#allocation0]
    %v205 = vld [vmem:[%s204] ss:$-1 sm:$0xff]
    %v206 = vrot.slane %v205, 1
    %207 = vst [vmem:[%s202] sm:$0xff] %v206
    %s208 = scalar_lea.vmem %s203, 8 [#allocation0]
    %s209 = scalar_lea.vmem %s208, 7 [#allocation0]
    %v210 = vld [vmem:[%s209] ss:$-1 sm:$0xff]
    %v211 = vrot.slane %v210, 1
    %v212 = vlaneseq
    %v213 = vshrl.u32 %v212, 7
    %vm214 = vcmp.lt.s32.totalorder %v213, 7
    %215 = vst.msk [vmem:[%s202] sm:$0xff] %vm214, %v211
    %s216 = scalar_lea.vmem [#allocation1], 24
    %s217 = scalar_lea.vmem [#allocation0], 48
    %s218 = scalar_lea.vmem %s217, 7 [#allocation0]
    %v219 = vld [vmem:[%s218] ss:$-1 sm:$0xff]
    %v220 = vrot.slane %v219, 1
    %221 = vst [vmem:[%s216] sm:$0xff] %v220
    %s222 = scalar_lea.vmem %s217, 8 [#allocation0]
    %s223 = scalar_lea.vmem %s222, 7 [#allocation0]
    %v224 = vld [vmem:[%s223] ss:$-1 sm:$0xff]
    %v225 = vrot.slane %v224, 1
    %v226 = vlaneseq
    %v227 = vshrl.u32 %v226, 7
    %vm228 = vcmp.lt.s32.totalorder %v227, 7
    %229 = vst.msk [vmem:[%s216] sm:$0xff] %vm228, %v225
    %s230 = scalar_lea.vmem [#allocation1], 32
    %s231 = scalar_lea.vmem [#allocation0], 64
    %s232 = scalar_lea.vmem %s231, 7 [#allocation0]
    %v233 = vld [vmem:[%s232] ss:$-1 sm:$0xff]
    %v234 = vrot.slane %v233, 1
    %235 = vst [vmem:[%s230] sm:$0xff] %v234
    %s236 = scalar_lea.vmem %s231, 8 [#allocation0]
    %s237 = scalar_lea.vmem %s236, 7 [#allocation0]
    %v238 = vld [vmem:[%s237] ss:$-1 sm:$0xff]
    %v239 = vrot.slane %v238, 1
    %v240 = vlaneseq
    %v241 = vshrl.u32 %v240, 7
    %vm242 = vcmp.lt.s32.totalorder %v241, 7
    %243 = vst.msk [vmem:[%s230] sm:$0xff] %vm242, %v239
    %s244 = scalar_lea.vmem [#allocation1], 40
    %s245 = scalar_lea.vmem [#allocation0], 80
    %s246 = scalar_lea.vmem %s245, 7 [#allocation0]
    %v247 = vld [vmem:[%s246] ss:$-1 sm:$0xff]
    %v248 = vrot.slane %v247, 1
    %249 = vst [vmem:[%s244] sm:$0xff] %v248
    %s250 = scalar_lea.vmem %s245, 8 [#allocation0]
    %s251 = scalar_lea.vmem %s250, 7 [#allocation0]
    %v252 = vld [vmem:[%s251] ss:$-1 sm:$0xff]
    %v253 = vrot.slane %v252, 1
    %v254 = vlaneseq
    %v255 = vshrl.u32 %v254, 7
    %vm256 = vcmp.lt.s32.totalorder %v255, 7
    %257 = vst.msk [vmem:[%s244] sm:$0xff] %vm256, %v253
    %s258 = scalar_lea.vmem [#allocation1], 48
    %s259 = scalar_lea.vmem [#allocation0], 96
    %s260 = scalar_lea.vmem %s259, 7 [#allocation0]
    %v261 = vld [vmem:[%s260] ss:$-1 sm:$0xff]
    %v262 = vrot.slane %v261, 1
    %263 = vst [vmem:[%s258] sm:$0xff] %v262
    %s264 = scalar_lea.vmem %s259, 8 [#allocation0]
    %s265 = scalar_lea.vmem %s264, 7 [#allocation0]
    %v266 = vld [vmem:[%s265] ss:$-1 sm:$0xff]
    %v267 = vrot.slane %v266, 1
    %v268 = vlaneseq
    %v269 = vshrl.u32 %v268, 7
    %vm270 = vcmp.lt.s32.totalorder %v269, 7
    %271 = vst.msk [vmem:[%s258] sm:$0xff] %vm270, %v267
    %s272 = scalar_lea.vmem [#allocation1], 56
    %s273 = scalar_lea.vmem [#allocation0], 112
    %s274 = scalar_lea.vmem %s273, 7 [#allocation0]
    %v275 = vld [vmem:[%s274] ss:$-1 sm:$0xff]
    %v276 = vrot.slane %v275, 1
    %277 = vst [vmem:[%s272] sm:$0xff] %v276
    %s278 = scalar_lea.vmem %s273, 8 [#allocation0]
    %s279 = scalar_lea.vmem %s278, 7 [#allocation0]
    %v280 = vld [vmem:[%s279] ss:$-1 sm:$0xff]
    %v281 = vrot.slane %v280, 1
    %v282 = vlaneseq
    %v283 = vshrl.u32 %v282, 7
    %vm284 = vcmp.lt.s32.totalorder %v283, 7
    %285 = vst.msk [vmem:[%s272] sm:$0xff] %vm284, %v281
    %s286 = scalar_lea.vmem [#allocation1], 64
    %s287 = scalar_lea.vmem [#allocation0], 128
    %s288 = scalar_lea.vmem %s287, 7 [#allocation0]
    %v289 = vld [vmem:[%s288] ss:$-1 sm:$0xff]
    %v290 = vrot.slane %v289, 1
    %291 = vst [vmem:[%s286] sm:$0xff] %v290
    %s292 = scalar_lea.vmem %s287, 8 [#allocation0]
    %s293 = scalar_lea.vmem %s292, 7 [#allocation0]
    %v294 = vld [vmem:[%s293] ss:$-1 sm:$0xff]
    %v295 = vrot.slane %v294, 1
    %v296 = vlaneseq
    %v297 = vshrl.u32 %v296, 7
    %vm298 = vcmp.lt.s32.totalorder %v297, 7
    %299 = vst.msk [vmem:[%s286] sm:$0xff] %vm298, %v295
    %s300 = scalar_lea.vmem [#allocation1], 72
    %s301 = scalar_lea.vmem [#allocation0], 144
    %s302 = scalar_lea.vmem %s301, 7 [#allocation0]
    %v303 = vld [vmem:[%s302] ss:$-1 sm:$0xff]
    %v304 = vrot.slane %v303, 1
    %305 = vst [vmem:[%s300] sm:$0xff] %v304
    %s306 = scalar_lea.vmem %s301, 8 [#allocation0]
    %s307 = scalar_lea.vmem %s306, 7 [#allocation0]
    %v308 = vld [vmem:[%s307] ss:$-1 sm:$0xff]
    %v309 = vrot.slane %v308, 1
    %v310 = vlaneseq
    %v311 = vshrl.u32 %v310, 7
    %vm312 = vcmp.lt.s32.totalorder %v311, 7
    %313 = vst.msk [vmem:[%s300] sm:$0xff] %vm312, %v309
    %s314 = scalar_lea.vmem [#allocation1], 80
    %s315 = scalar_lea.vmem [#allocation0], 160
    %s316 = scalar_lea.vmem %s315, 7 [#allocation0]
    %v317 = vld [vmem:[%s316] ss:$-1 sm:$0xff]
    %v318 = vrot.slane %v317, 1
    %319 = vst [vmem:[%s314] sm:$0xff] %v318
    %s320 = scalar_lea.vmem %s315, 8 [#allocation0]
    %s321 = scalar_lea.vmem %s320, 7 [#allocation0]
    %v322 = vld [vmem:[%s321] ss:$-1 sm:$0xff]
    %v323 = vrot.slane %v322, 1
    %v324 = vlaneseq
    %v325 = vshrl.u32 %v324, 7
    %vm326 = vcmp.lt.s32.totalorder %v325, 7
    %327 = vst.msk [vmem:[%s314] sm:$0xff] %vm326, %v323
    %s328 = scalar_lea.vmem [#allocation1], 88
    %s329 = scalar_lea.vmem [#allocation0], 176
    %s330 = scalar_lea.vmem %s329, 7 [#allocation0]
    %v331 = vld [vmem:[%s330] ss:$-1 sm:$0xff]
    %v332 = vrot.slane %v331, 1
    %333 = vst [vmem:[%s328] sm:$0xff] %v332
    %s334 = scalar_lea.vmem %s329, 8 [#allocation0]
    %s335 = scalar_lea.vmem %s334, 7 [#allocation0]
    %v336 = vld [vmem:[%s335] ss:$-1 sm:$0xff]
    %v337 = vrot.slane %v336, 1
    %v338 = vlaneseq
    %v339 = vshrl.u32 %v338, 7
    %vm340 = vcmp.lt.s32.totalorder %v339, 7
    %341 = vst.msk [vmem:[%s328] sm:$0xff] %vm340, %v337
    %s342 = scalar_lea.vmem [#allocation1], 96
    %s343 = scalar_lea.vmem [#allocation0], 192
    %s344 = scalar_lea.vmem %s343, 7 [#allocation0]
    %v345 = vld [vmem:[%s344] ss:$-1 sm:$0xff]
    %v346 = vrot.slane %v345, 1
    %347 = vst [vmem:[%s342] sm:$0xff] %v346
    %s348 = scalar_lea.vmem %s343, 8 [#allocation0]
    %s349 = scalar_lea.vmem %s348, 7 [#allocation0]
    %v350 = vld [vmem:[%s349] ss:$-1 sm:$0xff]
    %v351 = vrot.slane %v350, 1
    %v352 = vlaneseq
    %v353 = vshrl.u32 %v352, 7
    %vm354 = vcmp.lt.s32.totalorder %v353, 7
    %355 = vst.msk [vmem:[%s342] sm:$0xff] %vm354, %v351
    %s356 = scalar_lea.vmem [#allocation1], 104
    %s357 = scalar_lea.vmem [#allocation0], 208
    %s358 = scalar_lea.vmem %s357, 7 [#allocation0]
    %v359 = vld [vmem:[%s358] ss:$-1 sm:$0xff]
    %v360 = vrot.slane %v359, 1
    %361 = vst [vmem:[%s356] sm:$0xff] %v360
    %s362 = scalar_lea.vmem %s357, 8 [#allocation0]
    %s363 = scalar_lea.vmem %s362, 7 [#allocation0]
    %v364 = vld [vmem:[%s363] ss:$-1 sm:$0xff]
    %v365 = vrot.slane %v364, 1
    %v366 = vlaneseq
    %v367 = vshrl.u32 %v366, 7
    %vm368 = vcmp.lt.s32.totalorder %v367, 7
    %369 = vst.msk [vmem:[%s356] sm:$0xff] %vm368, %v365
    %s370 = scalar_lea.vmem [#allocation1], 112
    %s371 = scalar_lea.vmem [#allocation0], 224
    %s372 = scalar_lea.vmem %s371, 7 [#allocation0]
    %v373 = vld [vmem:[%s372] ss:$-1 sm:$0xff]
    %v374 = vrot.slane %v373, 1
    %375 = vst [vmem:[%s370] sm:$0xff] %v374
    %s376 = scalar_lea.vmem %s371, 8 [#allocation0]
    %s377 = scalar_lea.vmem %s376, 7 [#allocation0]
    %v378 = vld [vmem:[%s377] ss:$-1 sm:$0xff]
    %v379 = vrot.slane %v378, 1
    %v380 = vlaneseq
    %v381 = vshrl.u32 %v380, 7
    %vm382 = vcmp.lt.s32.totalorder %v381, 7
    %383 = vst.msk [vmem:[%s370] sm:$0xff] %vm382, %v379
    %s384 = scalar_lea.vmem [#allocation1], 120
    %s385 = scalar_lea.vmem [#allocation0], 240
    %s386 = scalar_lea.vmem %s385, 7 [#allocation0]
    %v387 = vld [vmem:[%s386] ss:$-1 sm:$0xff]
    %v388 = vrot.slane %v387, 1
    %389 = vst [vmem:[%s384] sm:$0xff] %v388
    %s390 = scalar_lea.vmem %s385, 8 [#allocation0]
    %s391 = scalar_lea.vmem %s390, 7 [#allocation0]
    %v392 = vld [vmem:[%s391] ss:$-1 sm:$0xff]
    %v393 = vrot.slane %v392, 1
    %v394 = vlaneseq
    %v395 = vshrl.u32 %v394, 7
    %vm396 = vcmp.lt.s32.totalorder %v395, 7
    %397 = vst.msk [vmem:[%s384] sm:$0xff] %vm396, %v393
    %s398 = scalar_lea.vmem [#allocation1], 128
    %s399 = scalar_lea.vmem [#allocation0], 256
    %s400 = scalar_lea.vmem %s399, 7 [#allocation0]
    %v401 = vld [vmem:[%s400] ss:$-1 sm:$0xff]
    %v402 = vrot.slane %v401, 1
    %403 = vst [vmem:[%s398] sm:$0xff] %v402
    %s404 = scalar_lea.vmem %s399, 8 [#allocation0]
    %s405 = scalar_lea.vmem %s404, 7 [#allocation0]
    %v406 = vld [vmem:[%s405] ss:$-1 sm:$0xff]
    %v407 = vrot.slane %v406, 1
    %v408 = vlaneseq
    %v409 = vshrl.u32 %v408, 7
    %vm410 = vcmp.lt.s32.totalorder %v409, 7
    %411 = vst.msk [vmem:[%s398] sm:$0xff] %vm410, %v407
    %s412 = scalar_lea.vmem [#allocation1], 136
    %s413 = scalar_lea.vmem [#allocation0], 272
    %s414 = scalar_lea.vmem %s413, 7 [#allocation0]
    %v415 = vld [vmem:[%s414] ss:$-1 sm:$0xff]
    %v416 = vrot.slane %v415, 1
    %417 = vst [vmem:[%s412] sm:$0xff] %v416
    %s418 = scalar_lea.vmem %s413, 8 [#allocation0]
    %s419 = scalar_lea.vmem %s418, 7 [#allocation0]
    %v420 = vld [vmem:[%s419] ss:$-1 sm:$0xff]
    %v421 = vrot.slane %v420, 1
    %v422 = vlaneseq
    %v423 = vshrl.u32 %v422, 7
    %vm424 = vcmp.lt.s32.totalorder %v423, 7
    %425 = vst.msk [vmem:[%s412] sm:$0xff] %vm424, %v421
    %s426 = scalar_lea.vmem [#allocation1], 144
    %s427 = scalar_lea.vmem [#allocation0], 288
    %s428 = scalar_lea.vmem %s427, 7 [#allocation0]
    %v429 = vld [vmem:[%s428] ss:$-1 sm:$0xff]
    %v430 = vrot.slane %v429, 1
    %431 = vst [vmem:[%s426] sm:$0xff] %v430
    %s432 = scalar_lea.vmem %s427, 8 [#allocation0]
    %s433 = scalar_lea.vmem %s432, 7 [#allocation0]
    %v434 = vld [vmem:[%s433] ss:$-1 sm:$0xff]
    %v435 = vrot.slane %v434, 1
    %v436 = vlaneseq
    %v437 = vshrl.u32 %v436, 7
    %vm438 = vcmp.lt.s32.totalorder %v437, 7
    %439 = vst.msk [vmem:[%s426] sm:$0xff] %vm438, %v435
    %s440 = scalar_lea.vmem [#allocation1], 152
    %s441 = scalar_lea.vmem [#allocation0], 304
    %s442 = scalar_lea.vmem %s441, 7 [#allocation0]
    %v443 = vld [vmem:[%s442] ss:$-1 sm:$0xff]
    %v444 = vrot.slane %v443, 1
    %445 = vst [vmem:[%s440] sm:$0xff] %v444
    %s446 = scalar_lea.vmem %s441, 8 [#allocation0]
    %s447 = scalar_lea.vmem %s446, 7 [#allocation0]
    %v448 = vld [vmem:[%s447] ss:$-1 sm:$0xff]
    %v449 = vrot.slane %v448, 1
    %v450 = vlaneseq
    %v451 = vshrl.u32 %v450, 7
    %vm452 = vcmp.lt.s32.totalorder %v451, 7
    %453 = vst.msk [vmem:[%s440] sm:$0xff] %vm452, %v449
    %s454 = scalar_lea.vmem [#allocation1], 160
    %s455 = scalar_lea.vmem [#allocation0], 320
    %s456 = scalar_lea.vmem %s455, 7 [#allocation0]
    %v457 = vld [vmem:[%s456] ss:$-1 sm:$0xff]
    %v458 = vrot.slane %v457, 1
    %459 = vst [vmem:[%s454] sm:$0xff] %v458
    %s460 = scalar_lea.vmem %s455, 8 [#allocation0]
    %s461 = scalar_lea.vmem %s460, 7 [#allocation0]
    %v462 = vld [vmem:[%s461] ss:$-1 sm:$0xff]
    %v463 = vrot.slane %v462, 1
    %v464 = vlaneseq
    %v465 = vshrl.u32 %v464, 7
    %vm466 = vcmp.lt.s32.totalorder %v465, 7
    %467 = vst.msk [vmem:[%s454] sm:$0xff] %vm466, %v463
    %s468 = scalar_lea.vmem [#allocation1], 168
    %s469 = scalar_lea.vmem [#allocation0], 336
    %s470 = scalar_lea.vmem %s469, 7 [#allocation0]
    %v471 = vld [vmem:[%s470] ss:$-1 sm:$0xff]
    %v472 = vrot.slane %v471, 1
    %473 = vst [vmem:[%s468] sm:$0xff] %v472
    %s474 = scalar_lea.vmem %s469, 8 [#allocation0]
    %s475 = scalar_lea.vmem %s474, 7 [#allocation0]
    %v476 = vld [vmem:[%s475] ss:$-1 sm:$0xff]
    %v477 = vrot.slane %v476, 1
    %v478 = vlaneseq
    %v479 = vshrl.u32 %v478, 7
    %vm480 = vcmp.lt.s32.totalorder %v479, 7
    %481 = vst.msk [vmem:[%s468] sm:$0xff] %vm480, %v477
    %s482 = scalar_lea.vmem [#allocation1], 176
    %s483 = scalar_lea.vmem [#allocation0], 352
    %s484 = scalar_lea.vmem %s483, 7 [#allocation0]
    %v485 = vld [vmem:[%s484] ss:$-1 sm:$0xff]
    %v486 = vrot.slane %v485, 1
    %487 = vst [vmem:[%s482] sm:$0xff] %v486
    %s488 = scalar_lea.vmem %s483, 8 [#allocation0]
    %s489 = scalar_lea.vmem %s488, 7 [#allocation0]
    %v490 = vld [vmem:[%s489] ss:$-1 sm:$0xff]
    %v491 = vrot.slane %v490, 1
    %v492 = vlaneseq
    %v493 = vshrl.u32 %v492, 7
    %vm494 = vcmp.lt.s32.totalorder %v493, 7
    %495 = vst.msk [vmem:[%s482] sm:$0xff] %vm494, %v491
    %s496 = scalar_lea.vmem [#allocation1], 184
    %s497 = scalar_lea.vmem [#allocation0], 368
    %s498 = scalar_lea.vmem %s497, 7 [#allocation0]
    %v499 = vld [vmem:[%s498] ss:$-1 sm:$0xff]
    %v500 = vrot.slane %v499, 1
    %501 = vst [vmem:[%s496] sm:$0xff] %v500
    %s502 = scalar_lea.vmem %s497, 8 [#allocation0]
    %s503 = scalar_lea.vmem %s502, 7 [#allocation0]
    %v504 = vld [vmem:[%s503] ss:$-1 sm:$0xff]
    %v505 = vrot.slane %v504, 1
    %v506 = vlaneseq
    %v507 = vshrl.u32 %v506, 7
    %vm508 = vcmp.lt.s32.totalorder %v507, 7
    %509 = vst.msk [vmem:[%s496] sm:$0xff] %vm508, %v505
    %s510 = scalar_lea.vmem [#allocation1], 192
    %s511 = scalar_lea.vmem [#allocation0], 384
    %s512 = scalar_lea.vmem %s511, 7 [#allocation0]
    %v513 = vld [vmem:[%s512] ss:$-1 sm:$0xff]
    %v514 = vrot.slane %v513, 1
    %515 = vst [vmem:[%s510] sm:$0xff] %v514
    %s516 = scalar_lea.vmem %s511, 8 [#allocation0]
    %s517 = scalar_lea.vmem %s516, 7 [#allocation0]
    %v518 = vld [vmem:[%s517] ss:$-1 sm:$0xff]
    %v519 = vrot.slane %v518, 1
    %v520 = vlaneseq
    %v521 = vshrl.u32 %v520, 7
    %vm522 = vcmp.lt.s32.totalorder %v521, 7
    %523 = vst.msk [vmem:[%s510] sm:$0xff] %vm522, %v519
    %s524 = scalar_lea.vmem [#allocation1], 200
    %s525 = scalar_lea.vmem [#allocation0], 400
    %s526 = scalar_lea.vmem %s525, 7 [#allocation0]
    %v527 = vld [vmem:[%s526] ss:$-1 sm:$0xff]
    %v528 = vrot.slane %v527, 1
    %529 = vst [vmem:[%s524] sm:$0xff] %v528
    %s530 = scalar_lea.vmem %s525, 8 [#allocation0]
    %s531 = scalar_lea.vmem %s530, 7 [#allocation0]
    %v532 = vld [vmem:[%s531] ss:$-1 sm:$0xff]
    %v533 = vrot.slane %v532, 1
    %v534 = vlaneseq
    %v535 = vshrl.u32 %v534, 7
    %vm536 = vcmp.lt.s32.totalorder %v535, 7
    %537 = vst.msk [vmem:[%s524] sm:$0xff] %vm536, %v533
    %s538 = scalar_lea.vmem [#allocation1], 208
    %s539 = scalar_lea.vmem [#allocation0], 416
    %s540 = scalar_lea.vmem %s539, 7 [#allocation0]
    %v541 = vld [vmem:[%s540] ss:$-1 sm:$0xff]
    %v542 = vrot.slane %v541, 1
    %543 = vst [vmem:[%s538] sm:$0xff] %v542
    %s544 = scalar_lea.vmem %s539, 8 [#allocation0]
    %s545 = scalar_lea.vmem %s544, 7 [#allocation0]
    %v546 = vld [vmem:[%s545] ss:$-1 sm:$0xff]
    %v547 = vrot.slane %v546, 1
    %v548 = vlaneseq
    %v549 = vshrl.u32 %v548, 7
    %vm550 = vcmp.lt.s32.totalorder %v549, 7
    %551 = vst.msk [vmem:[%s538] sm:$0xff] %vm550, %v547
    %s552 = scalar_lea.vmem [#allocation1], 216
    %s553 = scalar_lea.vmem [#allocation0], 432
    %s554 = scalar_lea.vmem %s553, 7 [#allocation0]
    %v555 = vld [vmem:[%s554] ss:$-1 sm:$0xff]
    %v556 = vrot.slane %v555, 1
    %557 = vst [vmem:[%s552] sm:$0xff] %v556
    %s558 = scalar_lea.vmem %s553, 8 [#allocation0]
    %s559 = scalar_lea.vmem %s558, 7 [#allocation0]
    %v560 = vld [vmem:[%s559] ss:$-1 sm:$0xff]
    %v561 = vrot.slane %v560, 1
    %v562 = vlaneseq
    %v563 = vshrl.u32 %v562, 7
    %vm564 = vcmp.lt.s32.totalorder %v563, 7
    %565 = vst.msk [vmem:[%s552] sm:$0xff] %vm564, %v561
    %s566 = scalar_lea.vmem [#allocation1], 224
    %s567 = scalar_lea.vmem [#allocation0], 448
    %s568 = scalar_lea.vmem %s567, 7 [#allocation0]
    %v569 = vld [vmem:[%s568] ss:$-1 sm:$0xff]
    %v570 = vrot.slane %v569, 1
    %571 = vst [vmem:[%s566] sm:$0xff] %v570
    %s572 = scalar_lea.vmem %s567, 8 [#allocation0]
    %s573 = scalar_lea.vmem %s572, 7 [#allocation0]
    %v574 = vld [vmem:[%s573] ss:$-1 sm:$0xff]
    %v575 = vrot.slane %v574, 1
    %v576 = vlaneseq
    %v577 = vshrl.u32 %v576, 7
    %vm578 = vcmp.lt.s32.totalorder %v577, 7
    %579 = vst.msk [vmem:[%s566] sm:$0xff] %vm578, %v575
    %s580 = scalar_lea.vmem [#allocation1], 232
    %s581 = scalar_lea.vmem [#allocation0], 464
    %s582 = scalar_lea.vmem %s581, 7 [#allocation0]
    %v583 = vld [vmem:[%s582] ss:$-1 sm:$0xff]
    %v584 = vrot.slane %v583, 1
    %585 = vst [vmem:[%s580] sm:$0xff] %v584
    %s586 = scalar_lea.vmem %s581, 8 [#allocation0]
    %s587 = scalar_lea.vmem %s586, 7 [#allocation0]
    %v588 = vld [vmem:[%s587] ss:$-1 sm:$0xff]
    %v589 = vrot.slane %v588, 1
    %v590 = vlaneseq
    %v591 = vshrl.u32 %v590, 7
    %vm592 = vcmp.lt.s32.totalorder %v591, 7
    %593 = vst.msk [vmem:[%s580] sm:$0xff] %vm592, %v589
    %s594 = scalar_lea.vmem [#allocation1], 240
    %s595 = scalar_lea.vmem [#allocation0], 480
    %s596 = scalar_lea.vmem %s595, 7 [#allocation0]
    %v597 = vld [vmem:[%s596] ss:$-1 sm:$0xff]
    %v598 = vrot.slane %v597, 1
    %599 = vst [vmem:[%s594] sm:$0xff] %v598
    %s600 = scalar_lea.vmem %s595, 8 [#allocation0]
    %s601 = scalar_lea.vmem %s600, 7 [#allocation0]
    %v602 = vld [vmem:[%s601] ss:$-1 sm:$0xff]
    %v603 = vrot.slane %v602, 1
    %v604 = vlaneseq
    %v605 = vshrl.u32 %v604, 7
    %vm606 = vcmp.lt.s32.totalorder %v605, 7
    %607 = vst.msk [vmem:[%s594] sm:$0xff] %vm606, %v603
    %s608 = scalar_lea.vmem [#allocation1], 248
    %s609 = scalar_lea.vmem [#allocation0], 496
    %s610 = scalar_lea.vmem %s609, 7 [#allocation0]
    %v611 = vld [vmem:[%s610] ss:$-1 sm:$0xff]
    %v612 = vrot.slane %v611, 1
    %613 = vst [vmem:[%s608] sm:$0xff] %v612
    %s614 = scalar_lea.vmem %s609, 8 [#allocation0]
    %s615 = scalar_lea.vmem %s614, 7 [#allocation0]
    %v616 = vld [vmem:[%s615] ss:$-1 sm:$0xff]
    %v617 = vrot.slane %v616, 1
    %v618 = vlaneseq
    %v619 = vshrl.u32 %v618, 7
    %vm620 = vcmp.lt.s32.totalorder %v619, 7
    %621 = vst.msk [vmem:[%s608] sm:$0xff] %vm620, %v617
    %s622 = scalar_lea.vmem [#allocation1], 256
    %s623 = scalar_lea.vmem [#allocation0], 512
    %s624 = scalar_lea.vmem %s623, 7 [#allocation0]
    %v625 = vld [vmem:[%s624] ss:$-1 sm:$0xff]
    %v626 = vrot.slane %v625, 1
    %627 = vst [vmem:[%s622] sm:$0xff] %v626
    %s628 = scalar_lea.vmem %s623, 8 [#allocation0]
    %s629 = scalar_lea.vmem %s628, 7 [#allocation0]
    %v630 = vld [vmem:[%s629] ss:$-1 sm:$0xff]
    %v631 = vrot.slane %v630, 1
    %v632 = vlaneseq
    %v633 = vshrl.u32 %v632, 7
    %vm634 = vcmp.lt.s32.totalorder %v633, 7
    %635 = vst.msk [vmem:[%s622] sm:$0xff] %vm634, %v631
    %s636 = scalar_lea.vmem [#allocation1], 264
    %s637 = scalar_lea.vmem [#allocation0], 528
    %s638 = scalar_lea.vmem %s637, 7 [#allocation0]
    %v639 = vld [vmem:[%s638] ss:$-1 sm:$0xff]
    %v640 = vrot.slane %v639, 1
    %641 = vst [vmem:[%s636] sm:$0xff] %v640
    %s642 = scalar_lea.vmem %s637, 8 [#allocation0]
    %s643 = scalar_lea.vmem %s642, 7 [#allocation0]
    %v644 = vld [vmem:[%s643] ss:$-1 sm:$0xff]
    %v645 = vrot.slane %v644, 1
    %v646 = vlaneseq
    %v647 = vshrl.u32 %v646, 7
    %vm648 = vcmp.lt.s32.totalorder %v647, 7
    %649 = vst.msk [vmem:[%s636] sm:$0xff] %vm648, %v645
    %s650 = scalar_lea.vmem [#allocation1], 272
    %s651 = scalar_lea.vmem [#allocation0], 544
    %s652 = scalar_lea.vmem %s651, 7 [#allocation0]
    %v653 = vld [vmem:[%s652] ss:$-1 sm:$0xff]
    %v654 = vrot.slane %v653, 1
    %655 = vst [vmem:[%s650] sm:$0xff] %v654
    %s656 = scalar_lea.vmem %s651, 8 [#allocation0]
    %s657 = scalar_lea.vmem %s656, 7 [#allocation0]
    %v658 = vld [vmem:[%s657] ss:$-1 sm:$0xff]
    %v659 = vrot.slane %v658, 1
    %v660 = vlaneseq
    %v661 = vshrl.u32 %v660, 7
    %vm662 = vcmp.lt.s32.totalorder %v661, 7
    %663 = vst.msk [vmem:[%s650] sm:$0xff] %vm662, %v659
    %s664 = scalar_lea.vmem [#allocation1], 280
    %s665 = scalar_lea.vmem [#allocation0], 560
    %s666 = scalar_lea.vmem %s665, 7 [#allocation0]
    %v667 = vld [vmem:[%s666] ss:$-1 sm:$0xff]
    %v668 = vrot.slane %v667, 1
    %669 = vst [vmem:[%s664] sm:$0xff] %v668
    %s670 = scalar_lea.vmem %s665, 8 [#allocation0]
    %s671 = scalar_lea.vmem %s670, 7 [#allocation0]
    %v672 = vld [vmem:[%s671] ss:$-1 sm:$0xff]
    %v673 = vrot.slane %v672, 1
    %v674 = vlaneseq
    %v675 = vshrl.u32 %v674, 7
    %vm676 = vcmp.lt.s32.totalorder %v675, 7
    %677 = vst.msk [vmem:[%s664] sm:$0xff] %vm676, %v673
    // Predicated region
    $region36: #{reverse.1} parent=1 // pred_check
      _
    $region37: #{reverse.1} parent=1 // pred_check_branch
      %679 = sbr.rel (0) target = $region39
    $region38: #{reverse.1} parent=1 // pred_region
      // Predicated region
      $region40: #{reverse.1} parent=38 // pred_check
        _
      $region41: #{reverse.1} parent=38 // pred_check_branch
        %681 = sbr.rel (0) target = $region43
      $region42: #{reverse.1} parent=38 // pred_region
        // Predicated region
        $region55: #{reverse.1} parent=42 // pred_check
          _
        $region56: #{reverse.1} parent=42 // pred_check_branch
          %767 = sbr.rel (0) target = $region58
        $region57: #{reverse.1} parent=42 // pred_region
          loop: start=0, step=1, limit=1
          $region59: #{reverse.1} parent=57 // loop_pre_header
            _
          $region60: #{reverse.1} parent=57 // loop_header
            %s769 = sphi 0, %s773
            %p770 = scmp.ge.s32.totalorder %s769, 1
            %s774 = sphi [#allocation1], [#allocation1]
            %s775 = sphi %s1, %s1
          $region61: #{reverse.1} parent=57 // loop_header_branch
            %772 = sbr.rel (%p770) target = $region65
          $region62: #{reverse.1} parent=57 // loop_body
            %v776 = vld [vmem:[%s774] sm:$0xff]
            %777 = vst [vmem:[%s775] sm:$0xff] %v776
            %v778 = vld [vmem:[%s774 + $0x8] sm:$0xff]
            %779 = vst [vmem:[%s775 + $0x8] sm:$0xff] %v778
            %v780 = vld [vmem:[%s774 + $0x10] sm:$0xff]
            %781 = vst [vmem:[%s775 + $0x10] sm:$0xff] %v780
            %v782 = vld [vmem:[%s774 + $0x18] sm:$0xff]
            %783 = vst [vmem:[%s775 + $0x18] sm:$0xff] %v782
            %v784 = vld [vmem:[%s774 + $0x20] sm:$0xff]
            %785 = vst [vmem:[%s775 + $0x20] sm:$0xff] %v784
            %v786 = vld [vmem:[%s774 + $0x28] sm:$0xff]
            %787 = vst [vmem:[%s775 + $0x28] sm:$0xff] %v786
            %v788 = vld [vmem:[%s774 + $0x30] sm:$0xff]
            %789 = vst [vmem:[%s775 + $0x30] sm:$0xff] %v788
            %v790 = vld [vmem:[%s774 + $0x38] sm:$0xff]
            %791 = vst [vmem:[%s775 + $0x38] sm:$0xff] %v790
            %v792 = vld [vmem:[%s774 + $0x40] sm:$0xff]
            %793 = vst [vmem:[%s775 + $0x40] sm:$0xff] %v792
            %v794 = vld [vmem:[%s774 + $0x48] sm:$0xff]
            %795 = vst [vmem:[%s775 + $0x48] sm:$0xff] %v794
            %v796 = vld [vmem:[%s774 + $0x50] sm:$0xff]
            %797 = vst [vmem:[%s775 + $0x50] sm:$0xff] %v796
            %v798 = vld [vmem:[%s774 + $0x58] sm:$0xff]
            %799 = vst [vmem:[%s775 + $0x58] sm:$0xff] %v798
            %v800 = vld [vmem:[%s774 + $0x60] sm:$0xff]
            %801 = vst [vmem:[%s775 + $0x60] sm:$0xff] %v800
            %v802 = vld [vmem:[%s774 + $0x68] sm:$0xff]
            %803 = vst [vmem:[%s775 + $0x68] sm:$0xff] %v802
            %v804 = vld [vmem:[%s774 + $0x70] sm:$0xff]
            %805 = vst [vmem:[%s775 + $0x70] sm:$0xff] %v804
            %v806 = vld [vmem:[%s774 + $0x78] sm:$0xff]
            %807 = vst [vmem:[%s775 + $0x78] sm:$0xff] %v806
            %v808 = vld [vmem:[%s774 + $0x80] sm:$0xff]
            %809 = vst [vmem:[%s775 + $0x80] sm:$0xff] %v808
            %v810 = vld [vmem:[%s774 + $0x88] sm:$0xff]
            %811 = vst [vmem:[%s775 + $0x88] sm:$0xff] %v810
            %v812 = vld [vmem:[%s774 + $0x90] sm:$0xff]
            %813 = vst [vmem:[%s775 + $0x90] sm:$0xff] %v812
            %v814 = vld [vmem:[%s774 + $0x98] sm:$0xff]
            %815 = vst [vmem:[%s775 + $0x98] sm:$0xff] %v814
            %v816 = vld [vmem:[%s774 + $0xa0] sm:$0xff]
            %817 = vst [vmem:[%s775 + $0xa0] sm:$0xff] %v816
            %v818 = vld [vmem:[%s774 + $0xa8] sm:$0xff]
            %819 = vst [vmem:[%s775 + $0xa8] sm:$0xff] %v818
            %v820 = vld [vmem:[%s774 + $0xb0] sm:$0xff]
            %821 = vst [vmem:[%s775 + $0xb0] sm:$0xff] %v820
            %v822 = vld [vmem:[%s774 + $0xb8] sm:$0xff]
            %823 = vst [vmem:[%s775 + $0xb8] sm:$0xff] %v822
            %v824 = vld [vmem:[%s774 + $0xc0] sm:$0xff]
            %825 = vst [vmem:[%s775 + $0xc0] sm:$0xff] %v824
            %v826 = vld [vmem:[%s774 + $0xc8] sm:$0xff]
            %827 = vst [vmem:[%s775 + $0xc8] sm:$0xff] %v826
            %v828 = vld [vmem:[%s774 + $0xd0] sm:$0xff]
            %829 = vst [vmem:[%s775 + $0xd0] sm:$0xff] %v828
            %v830 = vld [vmem:[%s774 + $0xd8] sm:$0xff]
            %831 = vst [vmem:[%s775 + $0xd8] sm:$0xff] %v830
            %v832 = vld [vmem:[%s774 + $0xe0] sm:$0xff]
            %833 = vst [vmem:[%s775 + $0xe0] sm:$0xff] %v832
            %v834 = vld [vmem:[%s774 + $0xe8] sm:$0xff]
            %835 = vst [vmem:[%s775 + $0xe8] sm:$0xff] %v834
            %v836 = vld [vmem:[%s774 + $0xf0] sm:$0xff]
            %837 = vst [vmem:[%s775 + $0xf0] sm:$0xff] %v836
            %v838 = vld [vmem:[%s774 + $0xf8] sm:$0xff]
            %839 = vst [vmem:[%s775 + $0xf8] sm:$0xff] %v838
            %v840 = vld [vmem:[%s774 + $0x100] sm:$0xff]
            %841 = vst [vmem:[%s775 + $0x100] sm:$0xff] %v840
            %v842 = vld [vmem:[%s774 + $0x108] sm:$0xff]
            %843 = vst [vmem:[%s775 + $0x108] sm:$0xff] %v842
            %v844 = vld [vmem:[%s774 + $0x110] sm:$0xff]
            %845 = vst [vmem:[%s775 + $0x110] sm:$0xff] %v844
            %v846 = vld [vmem:[%s774 + $0x118] sm:$0xff]
            %847 = vst [vmem:[%s775 + $0x118] sm:$0xff] %v846
          $region63: #{reverse.1} parent=57 // loop_footer
            %s773 = sadd.s32 1, %s769
          $region64: #{reverse.1} parent=57 // loop_footer_branch
            %768 = sbr.rel target = $region60
          $region65: #{reverse.1} parent=57 // loop_exit
            _
        $region58: #{reverse.1} parent=42 // pred_fallthru
          _
        // Predicated region
        $region66: #{reverse.1} parent=42 // pred_check
          _
        $region67: #{reverse.1} parent=42 // pred_check_branch
          %849 = sbr.rel target = $region69
        $region68: #{reverse.1} parent=42 // pred_region
          _
        $region69: #{reverse.1} parent=42 // pred_fallthru
          _
      $region43: #{reverse.1} parent=38 // pred_fallthru
        _
      // Predicated region
      $region44: #{reverse.1} parent=38 // pred_check
        _
      $region45: #{reverse.1} parent=38 // pred_check_branch
        %683 = sbr.rel target = $region47
      $region46: #{reverse.1} parent=38 // pred_region
        %s685 = ssub.s32 256, 1
        loop: start=0, step=1, limit=1
        $region48: #{reverse.1} parent=46 // loop_pre_header
          _
        $region49: #{reverse.1} parent=46 // loop_header
          %s687 = sphi 0, %s691
          %p688 = scmp.ge.s32.totalorder %s687, 1
          %s692 = sphi [#allocation1], [#allocation1]
          %s693 = sphi %s1, %s1
        $region50: #{reverse.1} parent=46 // loop_header_branch
          %690 = sbr.rel (%p688) target = $region54
        $region51: #{reverse.1} parent=46 // loop_body
          %v694 = vld [vmem:[%s692] sm:%s685]
          %695 = vst [vmem:[%s693] sm:%s685] %v694
          %v696 = vld [vmem:[%s692 + $0x8] sm:%s685]
          %697 = vst [vmem:[%s693 + $0x8] sm:%s685] %v696
          %v698 = vld [vmem:[%s692 + $0x10] sm:%s685]
          %699 = vst [vmem:[%s693 + $0x10] sm:%s685] %v698
          %v700 = vld [vmem:[%s692 + $0x18] sm:%s685]
          %701 = vst [vmem:[%s693 + $0x18] sm:%s685] %v700
          %v702 = vld [vmem:[%s692 + $0x20] sm:%s685]
          %703 = vst [vmem:[%s693 + $0x20] sm:%s685] %v702
          %v704 = vld [vmem:[%s692 + $0x28] sm:%s685]
          %705 = vst [vmem:[%s693 + $0x28] sm:%s685] %v704
          %v706 = vld [vmem:[%s692 + $0x30] sm:%s685]
          %707 = vst [vmem:[%s693 + $0x30] sm:%s685] %v706
          %v708 = vld [vmem:[%s692 + $0x38] sm:%s685]
          %709 = vst [vmem:[%s693 + $0x38] sm:%s685] %v708
          %v710 = vld [vmem:[%s692 + $0x40] sm:%s685]
          %711 = vst [vmem:[%s693 + $0x40] sm:%s685] %v710
          %v712 = vld [vmem:[%s692 + $0x48] sm:%s685]
          %713 = vst [vmem:[%s693 + $0x48] sm:%s685] %v712
          %v714 = vld [vmem:[%s692 + $0x50] sm:%s685]
          %715 = vst [vmem:[%s693 + $0x50] sm:%s685] %v714
          %v716 = vld [vmem:[%s692 + $0x58] sm:%s685]
          %717 = vst [vmem:[%s693 + $0x58] sm:%s685] %v716
          %v718 = vld [vmem:[%s692 + $0x60] sm:%s685]
          %719 = vst [vmem:[%s693 + $0x60] sm:%s685] %v718
          %v720 = vld [vmem:[%s692 + $0x68] sm:%s685]
          %721 = vst [vmem:[%s693 + $0x68] sm:%s685] %v720
          %v722 = vld [vmem:[%s692 + $0x70] sm:%s685]
          %723 = vst [vmem:[%s693 + $0x70] sm:%s685] %v722
          %v724 = vld [vmem:[%s692 + $0x78] sm:%s685]
          %725 = vst [vmem:[%s693 + $0x78] sm:%s685] %v724
          %v726 = vld [vmem:[%s692 + $0x80] sm:%s685]
          %727 = vst [vmem:[%s693 + $0x80] sm:%s685] %v726
          %v728 = vld [vmem:[%s692 + $0x88] sm:%s685]
          %729 = vst [vmem:[%s693 + $0x88] sm:%s685] %v728
          %v730 = vld [vmem:[%s692 + $0x90] sm:%s685]
          %731 = vst [vmem:[%s693 + $0x90] sm:%s685] %v730
          %v732 = vld [vmem:[%s692 + $0x98] sm:%s685]
          %733 = vst [vmem:[%s693 + $0x98] sm:%s685] %v732
          %v734 = vld [vmem:[%s692 + $0xa0] sm:%s685]
          %735 = vst [vmem:[%s693 + $0xa0] sm:%s685] %v734
          %v736 = vld [vmem:[%s692 + $0xa8] sm:%s685]
          %737 = vst [vmem:[%s693 + $0xa8] sm:%s685] %v736
          %v738 = vld [vmem:[%s692 + $0xb0] sm:%s685]
          %739 = vst [vmem:[%s693 + $0xb0] sm:%s685] %v738
          %v740 = vld [vmem:[%s692 + $0xb8] sm:%s685]
          %741 = vst [vmem:[%s693 + $0xb8] sm:%s685] %v740
          %v742 = vld [vmem:[%s692 + $0xc0] sm:%s685]
          %743 = vst [vmem:[%s693 + $0xc0] sm:%s685] %v742
          %v744 = vld [vmem:[%s692 + $0xc8] sm:%s685]
          %745 = vst [vmem:[%s693 + $0xc8] sm:%s685] %v744
          %v746 = vld [vmem:[%s692 + $0xd0] sm:%s685]
          %747 = vst [vmem:[%s693 + $0xd0] sm:%s685] %v746
          %v748 = vld [vmem:[%s692 + $0xd8] sm:%s685]
          %749 = vst [vmem:[%s693 + $0xd8] sm:%s685] %v748
          %v750 = vld [vmem:[%s692 + $0xe0] sm:%s685]
          %751 = vst [vmem:[%s693 + $0xe0] sm:%s685] %v750
          %v752 = vld [vmem:[%s692 + $0xe8] sm:%s685]
          %753 = vst [vmem:[%s693 + $0xe8] sm:%s685] %v752
          %v754 = vld [vmem:[%s692 + $0xf0] sm:%s685]
          %755 = vst [vmem:[%s693 + $0xf0] sm:%s685] %v754
          %v756 = vld [vmem:[%s692 + $0xf8] sm:%s685]
          %757 = vst [vmem:[%s693 + $0xf8] sm:%s685] %v756
          %v758 = vld [vmem:[%s692 + $0x100] sm:%s685]
          %759 = vst [vmem:[%s693 + $0x100] sm:%s685] %v758
          %v760 = vld [vmem:[%s692 + $0x108] sm:%s685]
          %761 = vst [vmem:[%s693 + $0x108] sm:%s685] %v760
          %v762 = vld [vmem:[%s692 + $0x110] sm:%s685]
          %763 = vst [vmem:[%s693 + $0x110] sm:%s685] %v762
          %v764 = vld [vmem:[%s692 + $0x118] sm:%s685]
          %765 = vst [vmem:[%s693 + $0x118] sm:%s685] %v764
        $region52: #{reverse.1} parent=46 // loop_footer
          %s691 = sadd.s32 1, %s687
        $region53: #{reverse.1} parent=46 // loop_footer_branch
          %686 = sbr.rel target = $region49
        $region54: #{reverse.1} parent=46 // loop_exit
          _
      $region47: #{reverse.1} parent=38 // pred_fallthru
        _
    $region39: #{reverse.1} parent=1 // pred_fallthru
      _
    %850 = vnop

</llo_original>
